<compile_context>
chip_gen: v6e
topology: v6e:2x2x1
jax: 0.10.0
libtpu: 0.0.40
codegen_flags: <defaults>
</compile_context>

<pallas_src>
import functools

import jax
import jax.numpy as jnp
from jax.experimental import pallas as pl
from jax.experimental.pallas import tpu as pltpu

_NEG_BIG = -1e30  # bias padding for padded vocab columns; exp() underflows to 0


def _round_up(x, m):
    return ((x + m - 1) // m) * m


def _vmem_budget_bytes():
    """~75% of physical VMEM per TensorCore (v5e/v6e: 128 MiB, v7x: 64 MiB)."""
    phys = None
    try:
        phys = int(pltpu.get_tpu_info().vmem_capacity_bytes)
    except Exception:
        phys = None
    if not phys:
        try:
            kind = jax.devices()[0].device_kind.lower()
            phys = 64 * 1024 * 1024 if "v7" in kind else 128 * 1024 * 1024
        except Exception:
            phys = 64 * 1024 * 1024
    return (phys * 3) // 4


# --------------------------------------------------------------------------
# Kernels
# --------------------------------------------------------------------------
def _fused_kernel(x_ref, w_ref, b_ref, o_ref, m_sc, l_sc):
    """Single pass: bf16 MXU matmul + bias, online max/sum-exp across vocab
    tiles, and an in-place log-softmax normalize at the last vocab tile.

    The output row slab (tm, V_pad) is the resident output block across the
    vocab grid axis, so raw logits never touch HBM.
    """
    j = pl.program_id(1)
    tn = w_ref.shape[1]

    @pl.when(j == 0)
    def _():
        m_sc[...] = jnp.full_like(m_sc, -jnp.inf)
        l_sc[...] = jnp.zeros_like(l_sc)

    logits = jnp.dot(x_ref[...], w_ref[...],
                     preferred_element_type=jnp.float32) + b_ref[...]
    col = pl.multiple_of(j * tn, 128)
    o_ref[:, pl.ds(col, tn)] = logits.astype(o_ref.dtype)

    m_prev = m_sc[...]
    m_new = jnp.maximum(m_prev, jnp.max(logits, axis=-1, keepdims=True))
    l_sc[...] = jnp.exp(m_prev - m_new) * l_sc[...] + jnp.sum(
        jnp.exp(logits - m_new), axis=-1, keepdims=True)
    m_sc[...] = m_new

    @pl.when(j == pl.num_programs(1) - 1)
    def _():
        lse = m_sc[...] + jnp.log(l_sc[...])
        o_ref[...] = (o_ref[...].astype(jnp.float32) - lse).astype(o_ref.dtype)


def _logits_lse_kernel(x_ref, w_ref, b_ref, logits_ref, lse_ref, m_sc, l_sc):
    """Two-pass fallback, pass 1: store raw logits + per-row log-sum-exp."""
    j = pl.program_id(1)

    @pl.when(j == 0)
    def _():
        m_sc[...] = jnp.full_like(m_sc, -jnp.inf)
        l_sc[...] = jnp.zeros_like(l_sc)

    logits = jnp.dot(x_ref[...], w_ref[...],
                     preferred_element_type=jnp.float32) + b_ref[...]
    logits_ref[...] = logits.astype(logits_ref.dtype)

    m_prev = m_sc[...]
    m_new = jnp.maximum(m_prev, jnp.max(logits, axis=-1, keepdims=True))
    l_sc[...] = jnp.exp(m_prev - m_new) * l_sc[...] + jnp.sum(
        jnp.exp(logits - m_new), axis=-1, keepdims=True)
    m_sc[...] = m_new

    @pl.when(j == pl.num_programs(1) - 1)
    def _():
        lse_ref[...] = m_sc[...] + jnp.log(l_sc[...])


def _normalize_kernel(logits_ref, lse_ref, o_ref):
    """Two-pass fallback, pass 2: log_softmax = logits - per-row LSE."""
    o_ref[...] = (logits_ref[...].astype(jnp.float32)
                  - lse_ref[...]).astype(o_ref.dtype)


# --------------------------------------------------------------------------
# Host-side wrappers
# --------------------------------------------------------------------------
def prepare_generator_params(w, b, *, tn=512):
    """One-time parameter prep (call once, NOT per forward step).

    w: (d_model, vocab) -- nn.Linear weight transposed.  b: (vocab,).
    Returns (w_padded_bf16, b_padded_f32, meta).
    """
    _, V = w.shape
    tn = min(tn, _round_up(V, 128))
    V_pad = _round_up(V, tn)
    w_p = jnp.pad(w.astype(jnp.bfloat16), ((0, 0), (0, V_pad - V)))
    b_p = jnp.pad(b.astype(jnp.float32), (0, V_pad - V),
                  constant_values=_NEG_BIG).reshape(1, V_pad)
    meta = {"vocab": int(V), "tn": int(tn)}
    return w_p, b_p, meta


def generator_forward(x, w_p, b_p, *, meta, tm=None, vmem_limit_bytes=None):
    """x: (..., d_model).  Returns log_softmax(x @ w + b, axis=-1)."""
    D, V_pad = w_p.shape
    V = meta["vocab"]
    tn = meta["tn"]
    assert x.shape[-1] == D, "d_model mismatch"

    lead = x.shape[:-1]
    R = 1
    for s in lead:
        R *= int(s)
    out_dtype = x.dtype
    out_bytes = jnp.dtype(out_dtype).itemsize

    budget = int(vmem_limit_bytes) if vmem_limit_bytes else _vmem_budget_bytes()

    # ---- row tiling ------------------------------------------------------
    if tm is None:
        tm = 1024                                   # weight-stream amortization
    tm = _round_up(min(int(tm), _round_up(R, 16)), 16)
    r_full = _round_up(R, 16)
    if r_full >= 512:
        # Keep >= 2 row tiles so the "parallel" row axis can shard across both
        # TensorCores on v7x.
        tm = min(tm, _round_up(r_full // 2, 16))

    def _pass1_bytes(tm_):
        blocks = (tm_ * D * 2            # x tile (bf16)
                  + D * tn * 2           # W tile (bf16)
                  + tn * 4               # bias tile (f32)
                  + tm_ * tn * out_bytes  # logits tile
                  + tm_ * 4)             # lse tile
        return 2 * blocks + 2 * tm_ * 4  # double-buffered + m/l scratch

    while tm > 16 and _pass1_bytes(tm) > budget:
        tm = max(16, _round_up(tm // 2, 16))

    R_pad = _round_up(R, tm)
    nr = R_pad // tm
    nv = V_pad // tn

    # ---- activations: single cast + (maybe) row pad -----------------------
    x2 = x.reshape(R, D).astype(jnp.bfloat16)
    if R_pad != R:
        x2 = jnp.pad(x2, ((0, R_pad - R), (0, 0)))

    in_specs = [
        pl.BlockSpec((tm, D), lambda i, j: (i, 0)),   # x row tile
        pl.BlockSpec((D, tn), lambda i, j: (0, j)),   # weight vocab tile
        pl.BlockSpec((1, tn), lambda i, j: (0, j)),   # bias vocab tile
    ]

    # ---- fused single-pass path -------------------------------------------
    fused_bytes = (2 * (tm * D * 2 + D * tn * 2 + tn * 4)   # pipelined inputs
                   + 2 * tm * V_pad * out_bytes             # resident out slab
                   + 4 * tm * 4)                            # m / l scratch
    if fused_bytes <= budget:
        out_pad = pl.pallas_call(
            _fused_kernel,
            out_shape=jax.ShapeDtypeStruct((R_pad, V_pad), out_dtype),
            grid_spec=pltpu.PrefetchScalarGridSpec(
                num_scalar_prefetch=0,
                grid=(nr, nv),
                in_specs=in_specs,
                out_specs=pl.BlockSpec((tm, V_pad), lambda i, j: (i, 0)),
                scratch_shapes=[pltpu.VMEM((tm, 1), jnp.float32),   # running max
                                pltpu.VMEM((tm, 1), jnp.float32)],  # running sum
            ),
            compiler_params=pltpu.CompilerParams(
                dimension_semantics=("parallel", "arbitrary"),
                vmem_limit_bytes=budget),
        )(x2, w_p, b_p)
    else:
        # ---- two-pass fallback (very large vocab) --------------------------
        logits, lse = pl.pallas_call(
            _logits_lse_kernel,
            out_shape=(jax.ShapeDtypeStruct((R_pad, V_pad), out_dtype),
                       jax.ShapeDtypeStruct((R_pad, 1), jnp.float32)),
            grid_spec=pltpu.PrefetchScalarGridSpec(
                num_scalar_prefetch=0,
                grid=(nr, nv),
                in_specs=in_specs,
                out_specs=(
                    pl.BlockSpec((tm, tn), lambda i, j: (i, j)),  # raw logits
                    pl.BlockSpec((tm, 1), lambda i, j: (i, 0)),   # per-row LSE
                ),
                scratch_shapes=[pltpu.VMEM((tm, 1), jnp.float32),
                                pltpu.VMEM((tm, 1), jnp.float32)],
            ),
            compiler_params=pltpu.CompilerParams(
                dimension_semantics=("parallel", "arbitrary"),
                vmem_limit_bytes=budget),
        )(x2, w_p, b_p)

        # Mem-bound elementwise normalize: enlarge the lane-dense vocab tile.
        def _pass2_bytes(tn2_):
            return 2 * (2 * tm * tn2_ * out_bytes + tm * 4)

        tn2 = tn
        while V_pad % (tn2 * 2) == 0 and _pass2_bytes(tn2 * 2) <= budget:
            tn2 *= 2

        out_pad = pl.pallas_call(
            _normalize_kernel,
            out_shape=jax.ShapeDtypeStruct((R_pad, V_pad), out_dtype),
            grid_spec=pltpu.PrefetchScalarGridSpec(
                num_scalar_prefetch=0,
                grid=(nr, V_pad // tn2),
                in_specs=[
                    pl.BlockSpec((tm, tn2), lambda i, j: (i, j)),
                    pl.BlockSpec((tm, 1), lambda i, j: (i, 0)),
                ],
                out_specs=pl.BlockSpec((tm, tn2), lambda i, j: (i, j)),
            ),
            compiler_params=pltpu.CompilerParams(
                dimension_semantics=("parallel", "parallel"),
                vmem_limit_bytes=budget),
            input_output_aliases={0: 0},   # normalize the logits buffer in place
        )(logits, lse)

    return out_pad[:R, :V].reshape(*lead, V)


# --------------------------------------------------------------------------
# Demo / self-check
# --------------------------------------------------------------------------
if __name__ == "__main__":
    # Small shapes consistent with the module: batch=2, seq=8, d_model=32, vocab=128
    B, S, D, V = 2, 8, 32, 128

    key = jax.random.PRNGKey(0)
    kx, kw, kb = jax.random.split(key, 3)

    x = jax.random.normal(kx, (B, S, D), dtype=jnp.float32)
    # deterministic "nn.Linear(d_model, vocab)" params (weight stored transposed)
    w = jax.random.normal(kw, (D, V), dtype=jnp.float32) * (1.0 / jnp.sqrt(D))
    b = jax.random.normal(kb, (V,), dtype=jnp.float32) * 0.01

    # One-time parameter prep, hoisted out of the forward (perf feedback #1).
    w_p, b_p, meta = prepare_generator_params(w, b)
    fwd = jax.jit(functools.partial(generator_forward, meta=meta))

    out = jax.block_until_ready(fwd(x, w_p, b_p))

    # Reference mirrors the kernel's bf16 operand cast (f32 accumulation).
    xb = x.astype(jnp.bfloat16).astype(jnp.float32)
    wb = w.astype(jnp.bfloat16).astype(jnp.float32)
    ref = jax.nn.log_softmax(jnp.einsum("bsd,dv->bsv", xb, wb) + b, axis=-1)

    assert out.shape == (B, S, V)
    assert jnp.allclose(out, ref, atol=1e-3, rtol=1e-3)

    print("KERNEL_OK")
</pallas_src>

<mosaic_0001>
module attributes {stable_mosaic.version = 11 : i64} {
  func.func @_fused_kernel(%arg0: i32, %arg1: i32, %arg2: memref<16x32xbf16, #tpu.memory_space<vmem>>, %arg3: memref<32x128xbf16, #tpu.memory_space<vmem>>, %arg4: memref<1x128xf32, #tpu.memory_space<vmem>>, %arg5: memref<16x128xf32, #tpu.memory_space<vmem>>, %arg6: memref<16x1xf32, #tpu.memory_space<vmem>>, %arg7: memref<16x1xf32, #tpu.memory_space<vmem>>) attributes {dimension_semantics = [#tpu.dimension_semantics<parallel>, #tpu.dimension_semantics<arbitrary>], iteration_bounds = array<i64: 1, 1>, scalar_prefetch = 0 : i64, scratch_operands = 2 : i64, tpu.core_type = #tpu.core_type<tc>, window_params = [{transform_indices = @transform_0, window_bounds = array<i64: 16, 32>}, {transform_indices = @transform_1, window_bounds = array<i64: 32, 128>}, {transform_indices = @transform_2, window_bounds = array<i64: 1, 128>}, {transform_indices = @transform_3, window_bounds = array<i64: 16, 128>}]} {
    %c0_i32 = arith.constant 0 : i32
    %0 = arith.cmpi eq, %arg1, %c0_i32 : i32
    %1 = arith.extui %0 : i1 to i32
    %c0_i32_0 = arith.constant 0 : i32
    %2 = arith.cmpi ne, %1, %c0_i32_0 : i32
    scf.if %2 {
      %cst_19 = arith.constant 0xFF800000 : f32
      %32 = vector.broadcast %cst_19 : f32 to vector<16x1xf32>
      %c0_20 = arith.constant 0 : index
      %c0_21 = arith.constant 0 : index
      %33 = vector.load %arg6[%c0_20, %c0_21] : memref<16x1xf32, #tpu.memory_space<vmem>>, vector<16x1xf32>
      tpu.vector_store %arg6[%c0_20, %c0_21], %32 {strides = array<i32>} : memref<16x1xf32, #tpu.memory_space<vmem>>, vector<16x1xf32>,
      %cst_22 = arith.constant 0.000000e+00 : f32
      %34 = vector.broadcast %cst_22 : f32 to vector<16x1xf32>
      %c0_23 = arith.constant 0 : index
      %c0_24 = arith.constant 0 : index
      %35 = vector.load %arg7[%c0_23, %c0_24] : memref<16x1xf32, #tpu.memory_space<vmem>>, vector<16x1xf32>
      tpu.vector_store %arg7[%c0_23, %c0_24], %34 {strides = array<i32>} : memref<16x1xf32, #tpu.memory_space<vmem>>, vector<16x1xf32>,
    } else {
    }
    %c0 = arith.constant 0 : index
    %c0_1 = arith.constant 0 : index
    %3 = vector.load %arg2[%c0, %c0_1] : memref<16x32xbf16, #tpu.memory_space<vmem>>, vector<16x32xbf16>
    %c0_2 = arith.constant 0 : index
    %c0_3 = arith.constant 0 : index
    %4 = vector.load %arg3[%c0_2, %c0_3] : memref<32x128xbf16, #tpu.memory_space<vmem>>, vector<32x128xbf16>
    %cst = arith.constant dense<0.000000e+00> : vector<16x128xf32>
    %5 = tpu.matmul %3, %4, %cst {dimension_numbers = #tpu.dot_dimension_numbers<[1], [0], [0], [1], [0, 0, 1, 1], [], []>} : vector<16x32xbf16>, vector<32x128xbf16>, vector<16x128xf32> -> vector<16x128xf32>
    %c0_4 = arith.constant 0 : index
    %c0_5 = arith.constant 0 : index
    %6 = vector.load %arg4[%c0_4, %c0_5] : memref<1x128xf32, #tpu.memory_space<vmem>>, vector<1x128xf32>
    %7 = vector.broadcast %6 : vector<1x128xf32> to vector<16x128xf32>
    %8 = arith.addf %5, %7 : vector<16x128xf32>
    %c128_i32 = arith.constant 128 : i32
    %9 = arith.muli %arg1, %c128_i32 : i32
    %10 = tpu.assume_multiple %9, 128 : i32
    %c0_6 = arith.constant 0 : index
    %11 = arith.index_cast %10 : i32 to index
    %12 = vector.load %arg5[%c0_6, %11] : memref<16x128xf32, #tpu.memory_space<vmem>>, vector<16x128xf32>
    tpu.vector_store %arg5[%c0_6, %11], %8 {strides = array<i32>} : memref<16x128xf32, #tpu.memory_space<vmem>>, vector<16x128xf32>,
    %c0_7 = arith.constant 0 : index
    %c0_8 = arith.constant 0 : index
    %13 = vector.load %arg6[%c0_7, %c0_8] : memref<16x1xf32, #tpu.memory_space<vmem>>, vector<16x1xf32>
    %cst_9 = arith.constant dense<0xFF800000> : vector<16xf32>
    %14 = vector.multi_reduction <maximumf>, %8, %cst_9 [1] : vector<16x128xf32> to vector<16xf32>
    %15 = vector.shape_cast %14 : vector<16xf32> to vector<16x1xf32>
    %16 = arith.maximumf %13, %15 : vector<16x1xf32>
    %17 = arith.subf %13, %16 : vector<16x1xf32>
    %18 = math.exp %17 : vector<16x1xf32>
    %c0_10 = arith.constant 0 : index
    %c0_11 = arith.constant 0 : index
    %19 = vector.load %arg7[%c0_10, %c0_11] : memref<16x1xf32, #tpu.memory_space<vmem>>, vector<16x1xf32>
    %20 = arith.mulf %18, %19 : vector<16x1xf32>
    %21 = vector.broadcast %16 : vector<16x1xf32> to vector<16x128xf32>
    %22 = arith.subf %8, %21 : vector<16x128xf32>
    %23 = math.exp %22 : vector<16x128xf32>
    %cst_12 = arith.constant dense<0.000000e+00> : vector<16xf32>
    %24 = vector.multi_reduction <add>, %23, %cst_12 [1] : vector<16x128xf32> to vector<16xf32>
    %25 = vector.shape_cast %24 : vector<16xf32> to vector<16x1xf32>
    %26 = arith.addf %20, %25 : vector<16x1xf32>
    %c0_13 = arith.constant 0 : index
    %c0_14 = arith.constant 0 : index
    %27 = vector.load %arg7[%c0_13, %c0_14] : memref<16x1xf32, #tpu.memory_space<vmem>>, vector<16x1xf32>
    tpu.vector_store %arg7[%c0_13, %c0_14], %26 {strides = array<i32>} : memref<16x1xf32, #tpu.memory_space<vmem>>, vector<16x1xf32>,
    %c0_15 = arith.constant 0 : index
    %c0_16 = arith.constant 0 : index
    %28 = vector.load %arg6[%c0_15, %c0_16] : memref<16x1xf32, #tpu.memory_space<vmem>>, vector<16x1xf32>
    tpu.vector_store %arg6[%c0_15, %c0_16], %16 {strides = array<i32>} : memref<16x1xf32, #tpu.memory_space<vmem>>, vector<16x1xf32>,
    %c0_i32_17 = arith.constant 0 : i32
    %29 = arith.cmpi eq, %arg1, %c0_i32_17 : i32
    %30 = arith.extui %29 : i1 to i32
    %c0_i32_18 = arith.constant 0 : i32
    %31 = arith.cmpi ne, %30, %c0_i32_18 : i32
    scf.if %31 {
      %c0_19 = arith.constant 0 : index
      %c0_20 = arith.constant 0 : index
      %32 = vector.load %arg6[%c0_19, %c0_20] : memref<16x1xf32, #tpu.memory_space<vmem>>, vector<16x1xf32>
      %c0_21 = arith.constant 0 : index
      %c0_22 = arith.constant 0 : index
      %33 = vector.load %arg7[%c0_21, %c0_22] : memref<16x1xf32, #tpu.memory_space<vmem>>, vector<16x1xf32>
      %34 = math.log %33 : vector<16x1xf32>
      %35 = arith.addf %32, %34 : vector<16x1xf32>
      %c0_23 = arith.constant 0 : index
      %c0_24 = arith.constant 0 : index
      %36 = vector.load %arg5[%c0_23, %c0_24] : memref<16x128xf32, #tpu.memory_space<vmem>>, vector<16x128xf32>
      %37 = vector.broadcast %35 : vector<16x1xf32> to vector<16x128xf32>
      %38 = arith.subf %36, %37 : vector<16x128xf32>
      %c0_25 = arith.constant 0 : index
      %c0_26 = arith.constant 0 : index
      %39 = vector.load %arg5[%c0_25, %c0_26] : memref<16x128xf32, #tpu.memory_space<vmem>>, vector<16x128xf32>
      tpu.vector_store %arg5[%c0_25, %c0_26], %38 {strides = array<i32>} : memref<16x128xf32, #tpu.memory_space<vmem>>, vector<16x128xf32>,
    } else {
    }
    return
  }
  func.func @transform_0(%arg0: i32, %arg1: i32) -> (i32, i32) {
    %c0_i32 = arith.constant 0 : i32
    %c0_i32_0 = arith.constant 0 : i32
    return %arg0, %c0_i32 : i32, i32
  }
  func.func @transform_1(%arg0: i32, %arg1: i32) -> (i32, i32) {
    %c0_i32 = arith.constant 0 : i32
    %c0_i32_0 = arith.constant 0 : i32
    return %c0_i32, %arg1 : i32, i32
  }
  func.func @transform_2(%arg0: i32, %arg1: i32) -> (i32, i32) {
    %c0_i32 = arith.constant 0 : i32
    %c0_i32_0 = arith.constant 0 : i32
    return %c0_i32, %arg1 : i32, i32
  }
  func.func @transform_3(%arg0: i32, %arg1: i32) -> (i32, i32) {
    %c0_i32 = arith.constant 0 : i32
    %c0_i32_0 = arith.constant 0 : i32
    return %arg0, %c0_i32 : i32, i32
  }
}

</mosaic_0001>

<llo_original>
// kernel: generator_forward.1
$region0: #{generator_forward.1}
  #allocation0 [shape = 'u32[]', space=smem, size = 0x4, offset = 0x4, fixed_abs, tag = 'smem constant byte address 0x4 - core index']
  #allocation1 [shape = 'u32[144,128]{1,0:T(1,128)}', space=vmem, size = 0x12000, scoped, tag = 'internal scratch']
  #allocation2 [shape = 'f32[16,1]{1,0:T(8,128)}', space=vmem, size = 0x2000, scoped, tag = 'scratch operand']
  #allocation3 [shape = 'f32[16,1]{1,0:T(8,128)}', space=vmem, size = 0x2000, scoped, tag = 'scratch operand']
  %s0 = inlined_call_operand.vmem [shape: bf16[16,32], index: 0, kind: input, shape index: {}]
  %s1 = inlined_call_operand.vmem [shape: bf16[32,128], index: 1, kind: input, shape index: {}]
  %s2 = inlined_call_operand.vmem [shape: f32[1,128], index: 2, kind: input, shape index: {}]
  %s3 = inlined_call_operand.hbm [shape: f32[16,128], index: 3, kind: output, shape index: {}]
  %s4 = sld [smem:[#allocation0]]
  $region30: #{generator_forward.1} parent=0
    _
  %s6 = ssub.s32 1, %s4
  %s7 = scalar_select 0, %s6, %s4
  $region1: #{generator_forward.1} parent=0
    #allocation4 [shape = 'u8[8192]{0}', space=vmem, size = 0x2000, scoped, tag = 'output window, operand 0, single buffered']
    #allocation5 [shape = 's32[1]{0}', space=sflag, size = 0x4, scoped, tag = 'scoped memory for generator_forward.1']
    %8 = vsyncpa [#allocation5], 0
    // Predicated region
    $region2: #{generator_forward.1} parent=1 // pred_check
      _
    $region3: #{generator_forward.1} parent=1 // pred_check_branch
      %10 = sbr.rel (0) target = $region5
    $region4: #{generator_forward.1} parent=1 // pred_region
      _
    $region5: #{generator_forward.1} parent=1 // pred_fallthru
      _
    // Predicated region
    $region6: #{generator_forward.1} parent=1 // pred_check
      _
    $region7: #{generator_forward.1} parent=1 // pred_check_branch
      %12 = sbr.rel (0) target = $region9
    $region8: #{generator_forward.1} parent=1 // pred_region
      _
    $region9: #{generator_forward.1} parent=1 // pred_fallthru
      _
    // Predicated region
    $region10: #{generator_forward.1} parent=1 // pred_check
      _
    $region11: #{generator_forward.1} parent=1 // pred_check_branch
      %14 = sbr.rel (0) target = $region13
    $region12: #{generator_forward.1} parent=1 // pred_region
      _
    $region13: #{generator_forward.1} parent=1 // pred_fallthru
      _
    %p16 = scmp.eq.s32.totalorder 0, 0
    // Predicated region
    $region14: #{generator_forward.1} parent=1 // pred_check
      %p17 = pneg %p16
    $region15: #{generator_forward.1} parent=1 // pred_check_branch
      %19 = sbr.rel (%p17) target = $region17
    $region16: #{generator_forward.1} parent=1 // pred_region
      %vm20 = vcmask 7168
      %21 = vst.msk [vmem:[#allocation2] sm:$0xff] %vm20, -inf
      %22 = vst.msk [vmem:[#allocation2 + $0x8] sm:$0xff] %vm20, -inf
      %23 = vst.msk [vmem:[#allocation3] sm:$0xff] %vm20, 0.0
      %24 = vst.msk [vmem:[#allocation3 + $0x8] sm:$0xff] %vm20, 0.0
    $region17: #{generator_forward.1} parent=1 // pred_fallthru
      _
    %v25 = vld [vmem:[%s0] sm:$0xf]
    %v26 = vld [vmem:[%s0 + $0x4] sm:$0xf]
    %v27 = vld [vmem:[%s1] sm:$0xf]
    %v28 = vld [vmem:[%s1 + $0x4] sm:$0xf]
    %v29 = vld [vmem:[%s1 + $0x8] sm:$0xf]
    %v30 = vld [vmem:[%s1 + $0xc] sm:$0xf]
    %v31 = vld [vmem:[%s2] sm:$0x1]
    %v33 = vlaneseq
    %v34 = vshrl.u32 %v33, 7
    %v35 = vsub.s32 0, %v34
    %v36 = vrot.slane %v31, %v35
    %v40 = vunpack.c.l.b16 %v25
    %v41 = vunpack.c.l.b16 %v26
    %v42 = vpack.c.b16 %v41, %v40
    %v47 = vunpack.c.l.b16 %v27
    %v48 = vunpack.c.l.b16 %v28
    %v49 = vunpack.c.l.b16 %v29
    %v50 = vunpack.c.l.b16 %v30
    %v51 = vpack.c.b16 %v48, %v47
    %v52 = vpack.c.b16 %v50, %v49
    %vm55 = vcmask 261120
    %v57 = vsel %vm55, %v42, 0
    %59 = vmatprep.subr.bf16.mxu0 0
    %60 = vmatpush1.bf16.msra.mxu0 0
    %61 = vmatprep.subr.bf16.mxu0 0
    %62 = vmatpush1.bf16.msra.mxu0 0
    %63 = vmatprep.subr.bf16.mxu0 0
    %64 = vmatpush1.bf16.msra.mxu0 0
    %65 = vmatprep.subr.bf16.mxu0 0
    %66 = vmatpush1.bf16.msra.mxu0 0
    %67 = vmatprep.subr.bf16.mxu0 0
    %68 = vmatpush1.bf16.msra.mxu0 0
    %69 = vmatprep.subr.bf16.mxu0 0
    %70 = vmatpush1.bf16.msra.mxu0 0
    %71 = vmatprep.subr.bf16.mxu0 0
    %72 = vmatpush1.bf16.msra.mxu0 %v52
    %73 = vmatprep.subr.bf16.mxu0 0
    %74 = vmatpush1.bf16.msra.mxu0 %v51
    %75 = vmatprep.subr.bf16.mxu0 0
    %76 = vmatpush2.bf16.msra.mxu0 0
    %77 = vmatprep.subr.bf16.mxu0 0
    %78 = vmatpush2.bf16.msra.mxu0 0
    %79 = vmatprep.subr.bf16.mxu0 0
    %80 = vmatpush2.bf16.msra.mxu0 0
    %81 = vmatprep.subr.bf16.mxu0 0
    %82 = vmatpush2.bf16.msra.mxu0 0
    %83 = vmatprep.subr.bf16.mxu0 0
    %84 = vmatpush2.bf16.msra.mxu0 0
    %85 = vmatprep.subr.bf16.mxu0 0
    %86 = vmatpush2.bf16.msra.mxu0 0
    %87 = vmatprep.subr.bf16.mxu0 0
    %88 = vmatpush2.bf16.msra.mxu0 0
    %89 = vmatprep.subr.bf16.mxu0 0
    %90 = vmatpush2.bf16.msra.mxu0 0
    %91 = vmatprep.mubr.bf16.mxu0 0
    %92 = vmatmul.mubr.bf16.gmra.mxu0 %v57
    %v93 = vpop.f32.mrf.mxu0
    %v94 = vadd.f32 %v36, %v93
    %v95 = vpop.f32.mrf.mxu0
    %v96 = vpop.f32.mrf.mxu0
    %v97 = vadd.f32 %v36, %v96
    %v98 = vpop.f32.mrf.mxu0
    %99 = vdwg.mxu0
    %s100 = smul.u32 0, 128
    %s101 = sshra.s32 %s100, 7
    %s102 = sand.u32 %s100, 127
    %s103 = scalar_lea.vmem [#allocation4], %s101
    %104 = vst [vmem:[%s103] sm:$0xff] %v94
    %105 = vst [vmem:[%s103 + $0x8] sm:$0xff] %v97
    %v106 = vld [vmem:[#allocation2] sm:$0xff]
    %v107 = vld [vmem:[#allocation2 + $0x8] sm:$0xff]
    %108 = vmax.xlane.f32.xlu0 %v94
    %v109 = vpop.xlane.xlu0 %108
    %110 = vmax.xlane.f32.xlu0 %v97
    %v111 = vpop.xlane.xlu0 %110
    %v112 = vmax.f32 %v106, %v109
    %v113 = vmax.f32 %v107, %v111
    %v114 = vsub.f32 %v106, %v112
    %v115 = vsub.f32 %v107, %v113
    %v116 = vmul.f32 %v114, 1.442695
    %v117 = vpow.pop %v116
    %v118 = vmul.f32 %v115, 1.442695
    %v119 = vpow.pop %v118
    %v120 = vld [vmem:[#allocation3] sm:$0xff]
    %v121 = vld [vmem:[#allocation3 + $0x8] sm:$0xff]
    %v122 = vmul.f32 %v117, %v120
    %v123 = vmul.f32 %v119, %v121
    %125 = vset.pattern.permute.xlu0 0
    %126 = vperm.xlu0 %125, %v112
    %v127 = vpop.permute.xlu0 %126
    %130 = vset.pattern.permute.xlu0 0
    %131 = vperm.xlu0 %130, %v113
    %v132 = vpop.permute.xlu0 %131
    %v134 = vsub.f32 %v94, %v127
    %v135 = vsub.f32 %v97, %v132
    %v136 = vmul.f32 %v134, 1.442695
    %v137 = vpow.pop %v136
    %v138 = vmul.f32 %v135, 1.442695
    %v139 = vpow.pop %v138
    %140 = vadd.xlane.f32.xlu0 %v137
    %v141 = vpop.xlane.xlu0 %140
    %142 = vadd.xlane.f32.xlu0 %v139
    %v143 = vpop.xlane.xlu0 %142
    %v144 = vadd.f32 %v122, %v141
    %v145 = vadd.f32 %v123, %v143
    %vm146 = vcmask 7168
    %147 = vst.msk [vmem:[#allocation3] sm:$0xff] %vm146, %v144
    %148 = vst.msk [vmem:[#allocation3 + $0x8] sm:$0xff] %vm146, %v145
    %149 = vst.msk [vmem:[#allocation2] sm:$0xff] %vm146, %v112
    %150 = vst.msk [vmem:[#allocation2 + $0x8] sm:$0xff] %vm146, %v113
    // Predicated region
    $region18: #{generator_forward.1} parent=1 // pred_check
      %p151 = pneg %p16
    $region19: #{generator_forward.1} parent=1 // pred_check_branch
      %153 = sbr.rel (%p151) target = $region21
    $region20: #{generator_forward.1} parent=1 // pred_region
      %v154 = vld [vmem:[#allocation2] sm:$0xff]
      %v155 = vld [vmem:[#allocation2 + $0x8] sm:$0xff]
      %v156 = vld [vmem:[#allocation3] sm:$0xff]
      %v157 = vld [vmem:[#allocation3 + $0x8] sm:$0xff]
      %v158 = vlog2.pop %v156
      %v159 = vmul.f32 %v158, 0.6931472
      %v160 = vlog2.pop %v157
      %v161 = vmul.f32 %v160, 0.6931472
      %v162 = vadd.f32 %v154, %v159
      %v163 = vadd.f32 %v155, %v161
      %v164 = vld [vmem:[#allocation4] sm:$0xff]
      %v165 = vld [vmem:[#allocation4 + $0x8] sm:$0xff]
      %167 = vset.pattern.permute.xlu0 0
      %168 = vperm.xlu0 %167, %v162
      %v169 = vpop.permute.xlu0 %168
      %172 = vset.pattern.permute.xlu0 0
      %173 = vperm.xlu0 %172, %v163
      %v174 = vpop.permute.xlu0 %173
      %v176 = vsub.f32 %v164, %v169
      %v177 = vsub.f32 %v165, %v174
      %178 = vst [vmem:[#allocation4] sm:$0xff] %v176
      %179 = vst [vmem:[#allocation4 + $0x8] sm:$0xff] %v177
    $region21: #{generator_forward.1} parent=1 // pred_fallthru
      _
    // Predicated region
    $region22: #{generator_forward.1} parent=1 // pred_check
      _
    $region23: #{generator_forward.1} parent=1 // pred_check_branch
      %181 = sbr.rel (0) target = $region25
    $region24: #{generator_forward.1} parent=1 // pred_region
      %s183 = ssub.s32 256, 256
      %184 = vsyncadd [#allocation5], %s183
      %s185 = sshll.u32 [#allocation4], 4
      %s186 = int_to_ptr.vmem [resolvable:$true] %s185
      %191 = dma.vmem_to_hbm [thread:$0]  %s186, 256, %s3, [#allocation5], 128, 128, 8
    $region25: #{generator_forward.1} parent=1 // pred_fallthru
      _
    // Predicated region
    $region26: #{generator_forward.1} parent=1 // pred_check
      _
    $region27: #{generator_forward.1} parent=1 // pred_check_branch
      %193 = sbr.rel (0) target = $region29
    $region28: #{generator_forward.1} parent=1 // pred_region
      %194 = dma.done [#allocation5], 256
    $region29: #{generator_forward.1} parent=1 // pred_fallthru
      _
    %195 = vsyncpa [#allocation5], 1

</llo_original>
